<compile_context>
chip_gen: v7x
topology: tpu7x:2x2x1
jax: 0.10.0
libtpu: 0.0.40
codegen_flags: <defaults>
</compile_context>

<pallas_src>
import math

import jax
import jax.numpy as jnp
from jax import lax
from jax.experimental import pallas as pl
from jax.experimental.pallas import tpu as pltpu


# ------------------------------------------------------------------ kernel --

def eclip_kernel(lens_ref, events_ref, w_ev_ref, b_ev_ref,
                 wm1_ref, bm1_ref, wm2_ref, bm2_ref,
                 base_ref, rowmask_ref,
                 wt_ref, bt_ref, gamma_ref, beta_ref, proj_ref, sel_ref,
                 ev_out_ref, txt_out_ref):
    # ========================= Event encoder ================================
    x = events_ref[...]                                    # (B, T, N, D_in)
    B, T, N, _ = x.shape

    # token pool (sum over patch tokens) -> (B, T, D_in); the 1/N scale is
    # folded into the temporal weight below.
    pooled = jnp.sum(x, axis=2)

    # masked temporal mean over valid frames
    L_i = lens_ref[...]                                    # (B, 1) int32
    t_idx = lax.broadcasted_iota(jnp.int32, (B, T), 1)
    mask = (t_idx < L_i).astype(jnp.float32)               # (B, T)
    L_f = jnp.maximum(L_i.astype(jnp.float32), 1.0)        # guard L >= 1
    inv_LN = pl.reciprocal(L_f * float(N), approx=True)    # EUP, off VPU path
    w_time = mask * inv_LN                                  # (B, T)
    ev_pre = jnp.sum(pooled * w_time[:, :, None], axis=1)  # (B, D_in)

    # single whole-batch projection + L2 normalization
    feat = jnp.dot(ev_pre, w_ev_ref[...],
                   preferred_element_type=jnp.float32) + b_ev_ref[...]  # (B, D)
    ev = feat * lax.rsqrt(jnp.sum(feat * feat, axis=-1, keepdims=True))
    ev_out_ref[...] = ev

    # ================== Meta-net (event-conditioned ctx bias) ================
    # forward uses Text_Prompts[0, :, :, :]  -> bias from batch element 0 only
    ev0 = ev[0:1, :]                                                    # (1, D)
    h1 = jnp.maximum(
        jnp.dot(ev0, wm1_ref[...], preferred_element_type=jnp.float32)
        + bm1_ref[...], 0.0)
    bias = jnp.dot(h1, wm2_ref[...],
                   preferred_element_type=jnp.float32) + bm2_ref[...]   # (1, De)

    # ===================== Prompts + text encoder ============================
    # base_ref   : (rows, De)  static [prefix | ctx-variant | suffix] + pos emb
    # rowmask_ref: (rows, 1)   1.0 at ctx-token rows (event-bias placement)
    x2 = base_ref[...] + rowmask_ref[...] * bias                        # (rows, De)

    # TODO(synk): full multi-head-attention transformer stack not replicated;
    # a single residual MLP block stands in for it.
    h = x2 + jnp.maximum(
        jnp.dot(x2, wt_ref[...], preferred_element_type=jnp.float32)
        + bt_ref[...], 0.0)                                             # (rows, De)

    # EOT-token extraction as one block-diagonal selection matmul (MXU)
    eot = jnp.dot(sel_ref[...], h,
                  preferred_element_type=jnp.float32)                   # (VC, De)

    # ln_final + text projection + per-variant L2 normalization
    mu = jnp.mean(eot, axis=-1, keepdims=True)
    var = jnp.mean((eot - mu) ** 2, axis=-1, keepdims=True)
    normed = (eot - mu) * lax.rsqrt(var + 1e-5) * gamma_ref[...] + beta_ref[...]
    txt = jnp.dot(normed, proj_ref[...],
                  preferred_element_type=jnp.float32)                   # (VC, Do)
    txt = txt * lax.rsqrt(jnp.sum(txt * txt, axis=-1, keepdims=True))

    # (text_features_e_init + text_features_e_lernable) / 2.0
    n_cls = txt_out_ref.shape[0]
    txt_out_ref[...] = 0.5 * (txt[:n_cls, :] + txt[n_cls:, :])


# ----------------------------------------------------------------- wrapper --

def _vmem():
    return pl.BlockSpec(memory_space=pltpu.MemorySpace.VMEM)


def eclip_forward(params, events, actual_event_length, class_idxs):
    B, T, N, D_in = events.shape
    D_out = params['w_ev'].shape[1]
    D_emb = params['ctx_init'].shape[1]
    n_ctx = params['ctx_init'].shape[0]
    n_suf = params['suffix_all'].shape[1]
    n_tok = 1 + n_ctx + n_suf
    n_cls = class_idxs.shape[0]
    n_var = 2                              # init ctx + learnable ctx
    VC = n_var * n_cls
    rows = VC * n_tok

    # ---------------- static prompt assembly (pure glue, no event data) -----
    prefix = params['prefix_all'][class_idxs]              # (n_cls, 1, De)
    suffix = params['suffix_all'][class_idxs]              # (n_cls, n_suf, De)
    eot_pos = params['eot_pos_all'][class_idxs]            # (n_cls,)

    # per (variant, class): [prefix | ctx_variant | suffix] + positional emb
    ctx_stack = jnp.stack([params['ctx_init'], params['ctx_learn']], axis=0)
    prompts = jnp.concatenate(
        [jnp.broadcast_to(prefix[None], (n_var, n_cls, 1, D_emb)),
         jnp.broadcast_to(ctx_stack[:, None], (n_var, n_cls, n_ctx, D_emb)),
         jnp.broadcast_to(suffix[None], (n_var, n_cls, n_suf, D_emb))],
        axis=2) + params['pos_emb'][None, None, :, :]      # (n_var,n_cls,n_tok,De)
    # row index = v*n_cls*n_tok + c*n_tok + t
    base_flat = prompts.reshape(rows, D_emb)

    # rows that receive the event-conditioned bias (the ctx tokens)
    tok_mask = jnp.zeros((n_tok,), jnp.float32).at[1:1 + n_ctx].set(1.0)
    row_mask = jnp.tile(tok_mask, (VC,)).reshape(rows, 1)

    # EOT selection matrix, block-diagonal over (variant, class): (VC, rows)
    onehot = jax.nn.one_hot(eot_pos, n_tok, dtype=jnp.float32)   # (n_cls, n_tok)
    oh2 = jnp.tile(onehot, (n_var, 1))                           # (VC, n_tok)
    eye_vc = jnp.eye(VC, dtype=jnp.float32)
    sel = (eye_vc[:, :, None] * oh2[:, None, :]).reshape(VC, rows)

    lens = actual_event_length.astype(jnp.int32).reshape(B, 1)

    # ---------------------------- fused kernel ------------------------------
    ev_out, txt_out = pl.pallas_call(
        eclip_kernel,
        out_shape=(jax.ShapeDtypeStruct((B, D_out), jnp.float32),
                   jax.ShapeDtypeStruct((n_cls, D_out), jnp.float32)),
        in_specs=[_vmem() for _ in range(16)],
        out_specs=(_vmem(), _vmem()),
    )(lens, events, params['w_ev'], params['b_ev'],
      params['wm1'], params['bm1'], params['wm2'], params['bm2'],
      base_flat, row_mask,
      params['wt'], params['bt'], params['gamma'], params['beta'],
      params['proj'], sel)

    return ev_out, txt_out, params['logit_scale']


# --------------------------------------------------------------------- main --

def make_params(key):
    # lane-dense feature dims (multiples of 128) per the TPU layout rules
    D_in, D_emb, D_out, D_hid = 128, 128, 128, 128
    n_all_cls, n_ctx, n_suf = 10, 4, 3
    n_tok = 1 + n_ctx + n_suf
    ks = jax.random.split(key, 10)
    p = {
        'w_ev':  jax.random.normal(ks[0], (D_in, D_out), jnp.float32) / math.sqrt(D_in),
        'b_ev':  jnp.zeros((1, D_out), jnp.float32),
        'wm1':   jax.random.normal(ks[1], (D_out, D_hid), jnp.float32) / math.sqrt(D_out),
        'bm1':   jnp.zeros((1, D_hid), jnp.float32),
        'wm2':   jax.random.normal(ks[2], (D_hid, D_emb), jnp.float32) / math.sqrt(D_hid),
        'bm2':   jnp.zeros((1, D_emb), jnp.float32),
        'ctx_init':  0.02 * jax.random.normal(ks[3], (n_ctx, D_emb), jnp.float32),
        'ctx_learn': 0.02 * jax.random.normal(ks[4], (n_ctx, D_emb), jnp.float32),
        'prefix_all': jax.random.normal(ks[5], (n_all_cls, 1, D_emb), jnp.float32),
        'suffix_all': jax.random.normal(ks[6], (n_all_cls, n_suf, D_emb), jnp.float32),
        'eot_pos_all': (1 + n_ctx + jnp.arange(n_all_cls, dtype=jnp.int32) % n_suf),
        'pos_emb': 0.01 * jax.random.normal(ks[7], (n_tok, D_emb), jnp.float32),
        'wt':    jax.random.normal(ks[8], (D_emb, D_emb), jnp.float32) / math.sqrt(D_emb),
        'bt':    jnp.zeros((1, D_emb), jnp.float32),
        'gamma': jnp.ones((1, D_emb), jnp.float32),
        'beta':  jnp.zeros((1, D_emb), jnp.float32),
        'proj':  jax.random.normal(ks[9], (D_emb, D_out), jnp.float32) / math.sqrt(D_emb),
        'logit_scale': jnp.exp(jnp.float32(math.log(1.0 / 0.07))),
    }
    return p


if __name__ == "__main__":
    key = jax.random.PRNGKey(0)
    k_ev, k_p = jax.random.split(key)

    B, T, N, D_in = 2, 4, 16, 128
    events = jax.random.normal(k_ev, (B, T, N, D_in), jnp.float32)
    actual_event_length = jnp.array([3, 2], dtype=jnp.int32)
    class_idxs = jnp.array([0, 2, 4, 6, 8], dtype=jnp.int32)

    params = make_params(k_p)

    fwd = jax.jit(eclip_forward)
    event_features, text_features, logit_scale = fwd(
        params, events, actual_event_length, class_idxs)

    jax.block_until_ready((event_features, text_features, logit_scale))

    assert event_features.shape == (B, 128)
    assert text_features.shape == (class_idxs.shape[0], 128)
    assert bool(jnp.all(jnp.isfinite(event_features)))
    assert bool(jnp.all(jnp.isfinite(text_features)))
    print("KERNEL_OK")
</pallas_src>

<mosaic_0001>
module attributes {stable_mosaic.version = 11 : i64} {
  func.func @eclip_kernel(%arg0: memref<2x1xi32, #tpu.memory_space<vmem>>, %arg1: memref<2x4x16x128xf32, #tpu.memory_space<vmem>>, %arg2: memref<128x128xf32, #tpu.memory_space<vmem>>, %arg3: memref<1x128xf32, #tpu.memory_space<vmem>>, %arg4: memref<128x128xf32, #tpu.memory_space<vmem>>, %arg5: memref<1x128xf32, #tpu.memory_space<vmem>>, %arg6: memref<128x128xf32, #tpu.memory_space<vmem>>, %arg7: memref<1x128xf32, #tpu.memory_space<vmem>>, %arg8: memref<80x128xf32, #tpu.memory_space<vmem>>, %arg9: memref<80x1xf32, #tpu.memory_space<vmem>>, %arg10: memref<128x128xf32, #tpu.memory_space<vmem>>, %arg11: memref<1x128xf32, #tpu.memory_space<vmem>>, %arg12: memref<1x128xf32, #tpu.memory_space<vmem>>, %arg13: memref<1x128xf32, #tpu.memory_space<vmem>>, %arg14: memref<128x128xf32, #tpu.memory_space<vmem>>, %arg15: memref<10x80xf32, #tpu.memory_space<vmem>>, %arg16: memref<2x128xf32, #tpu.memory_space<vmem>>, %arg17: memref<5x128xf32, #tpu.memory_space<vmem>>) attributes {dimension_semantics = [], scalar_prefetch = 0 : i64, scratch_operands = 0 : i64, tpu.core_type = #tpu.core_type<tc>} {
    %c0 = arith.constant 0 : index
    %c0_0 = arith.constant 0 : index
    %c0_1 = arith.constant 0 : index
    %c0_2 = arith.constant 0 : index
    %0 = vector.load %arg1[%c0, %c0_0, %c0_1, %c0_2] : memref<2x4x16x128xf32, #tpu.memory_space<vmem>>, vector<2x4x16x128xf32>
    %cst = arith.constant dense<0.000000e+00> : vector<2x4x128xf32>
    %1 = vector.multi_reduction <add>, %0, %cst [2] : vector<2x4x16x128xf32> to vector<2x4x128xf32>
    %c0_3 = arith.constant 0 : index
    %c0_4 = arith.constant 0 : index
    %2 = vector.load %arg0[%c0_3, %c0_4] : memref<2x1xi32, #tpu.memory_space<vmem>>, vector<2x1xi32>
    %3 = tpu.iota {dimensions = array<i32: 1>} : vector<2x4xi32>
    %4 = vector.broadcast %2 : vector<2x1xi32> to vector<2x4xi32>
    %5 = arith.cmpi slt, %3, %4 : vector<2x4xi32>
    %6 = arith.extui %5 : vector<2x4xi1> to vector<2x4xi32>
    %7 = arith.sitofp %6 : vector<2x4xi32> to vector<2x4xf32>
    %8 = arith.sitofp %2 : vector<2x1xi32> to vector<2x1xf32>
    %cst_5 = arith.constant 1.000000e+00 : f32
    %9 = vector.broadcast %cst_5 : f32 to vector<2x1xf32>
    %10 = arith.maximumf %8, %9 : vector<2x1xf32>
    %cst_6 = arith.constant 1.600000e+01 : f32
    %11 = vector.broadcast %cst_6 : f32 to vector<2x1xf32>
    %12 = arith.mulf %10, %11 : vector<2x1xf32>
    %13 = tpu.reciprocal %12 {approx = true} : vector<2x1xf32> -> vector<2x1xf32>
    %14 = vector.broadcast %13 : vector<2x1xf32> to vector<2x4xf32>
    %15 = arith.mulf %7, %14 : vector<2x4xf32>
    %16 = vector.shape_cast %15 : vector<2x4xf32> to vector<2x4x1xf32>
    %17 = vector.broadcast %16 : vector<2x4x1xf32> to vector<2x4x128xf32>
    %18 = arith.mulf %1, %17 : vector<2x4x128xf32>
    %cst_7 = arith.constant dense<0.000000e+00> : vector<2x128xf32>
    %19 = vector.multi_reduction <add>, %18, %cst_7 [1] : vector<2x4x128xf32> to vector<2x128xf32>
    %c0_8 = arith.constant 0 : index
    %c0_9 = arith.constant 0 : index
    %20 = vector.load %arg2[%c0_8, %c0_9] : memref<128x128xf32, #tpu.memory_space<vmem>>, vector<128x128xf32>
    %cst_10 = arith.constant dense<0.000000e+00> : vector<2x128xf32>
    %21 = tpu.matmul %19, %20, %cst_10 {dimension_numbers = #tpu.dot_dimension_numbers<[1], [0], [0], [1], [0, 0, 1, 1], [], []>} : vector<2x128xf32>, vector<128x128xf32>, vector<2x128xf32> -> vector<2x128xf32>
    %c0_11 = arith.constant 0 : index
    %c0_12 = arith.constant 0 : index
    %22 = vector.load %arg3[%c0_11, %c0_12] : memref<1x128xf32, #tpu.memory_space<vmem>>, vector<1x128xf32>
    %23 = vector.broadcast %22 : vector<1x128xf32> to vector<2x128xf32>
    %24 = arith.addf %21, %23 : vector<2x128xf32>
    %25 = arith.mulf %24, %24 : vector<2x128xf32>
    %cst_13 = arith.constant dense<0.000000e+00> : vector<2xf32>
    %26 = vector.multi_reduction <add>, %25, %cst_13 [1] : vector<2x128xf32> to vector<2xf32>
    %27 = vector.shape_cast %26 : vector<2xf32> to vector<2x1xf32>
    %28 = math.rsqrt %27 : vector<2x1xf32>
    %29 = vector.broadcast %28 : vector<2x1xf32> to vector<2x128xf32>
    %30 = arith.mulf %24, %29 : vector<2x128xf32>
    %c0_14 = arith.constant 0 : index
    %c0_15 = arith.constant 0 : index
    %31 = vector.load %arg16[%c0_14, %c0_15] : memref<2x128xf32, #tpu.memory_space<vmem>>, vector<2x128xf32>
    tpu.vector_store %arg16[%c0_14, %c0_15], %30 {strides = array<i32>} : memref<2x128xf32, #tpu.memory_space<vmem>>, vector<2x128xf32>,
    %32 = vector.extract_strided_slice %30 {offsets = [0, 0], sizes = [1, 128], strides = [1, 1]} : vector<2x128xf32> to vector<1x128xf32>
    %c0_16 = arith.constant 0 : index
    %c0_17 = arith.constant 0 : index
    %33 = vector.load %arg4[%c0_16, %c0_17] : memref<128x128xf32, #tpu.memory_space<vmem>>, vector<128x128xf32>
    %cst_18 = arith.constant dense<0.000000e+00> : vector<1x128xf32>
    %34 = tpu.matmul %32, %33, %cst_18 {dimension_numbers = #tpu.dot_dimension_numbers<[1], [0], [0], [1], [0, 0, 1, 1], [], []>} : vector<1x128xf32>, vector<128x128xf32>, vector<1x128xf32> -> vector<1x128xf32>
    %c0_19 = arith.constant 0 : index
    %c0_20 = arith.constant 0 : index
    %35 = vector.load %arg5[%c0_19, %c0_20] : memref<1x128xf32, #tpu.memory_space<vmem>>, vector<1x128xf32>
    %36 = arith.addf %34, %35 : vector<1x128xf32>
    %cst_21 = arith.constant 0.000000e+00 : f32
    %37 = vector.broadcast %cst_21 : f32 to vector<1x128xf32>
    %38 = arith.maximumf %36, %37 : vector<1x128xf32>
    %c0_22 = arith.constant 0 : index
    %c0_23 = arith.constant 0 : index
    %39 = vector.load %arg6[%c0_22, %c0_23] : memref<128x128xf32, #tpu.memory_space<vmem>>, vector<128x128xf32>
    %cst_24 = arith.constant dense<0.000000e+00> : vector<1x128xf32>
    %40 = tpu.matmul %38, %39, %cst_24 {dimension_numbers = #tpu.dot_dimension_numbers<[1], [0], [0], [1], [0, 0, 1, 1], [], []>} : vector<1x128xf32>, vector<128x128xf32>, vector<1x128xf32> -> vector<1x128xf32>
    %c0_25 = arith.constant 0 : index
    %c0_26 = arith.constant 0 : index
    %41 = vector.load %arg7[%c0_25, %c0_26] : memref<1x128xf32, #tpu.memory_space<vmem>>, vector<1x128xf32>
    %42 = arith.addf %40, %41 : vector<1x128xf32>
    %c0_27 = arith.constant 0 : index
    %c0_28 = arith.constant 0 : index
    %43 = vector.load %arg8[%c0_27, %c0_28] : memref<80x128xf32, #tpu.memory_space<vmem>>, vector<80x128xf32>
    %c0_29 = arith.constant 0 : index
    %c0_30 = arith.constant 0 : index
    %44 = vector.load %arg9[%c0_29, %c0_30] : memref<80x1xf32, #tpu.memory_space<vmem>>, vector<80x1xf32>
    %45 = vector.broadcast %44 : vector<80x1xf32> to vector<80x128xf32>
    %46 = vector.broadcast %42 : vector<1x128xf32> to vector<80x128xf32>
    %47 = arith.mulf %45, %46 : vector<80x128xf32>
    %48 = arith.addf %43, %47 : vector<80x128xf32>
    %c0_31 = arith.constant 0 : index
    %c0_32 = arith.constant 0 : index
    %49 = vector.load %arg10[%c0_31, %c0_32] : memref<128x128xf32, #tpu.memory_space<vmem>>, vector<128x128xf32>
    %cst_33 = arith.constant dense<0.000000e+00> : vector<80x128xf32>
    %50 = tpu.matmul %48, %49, %cst_33 {dimension_numbers = #tpu.dot_dimension_numbers<[1], [0], [0], [1], [0, 0, 1, 1], [], []>} : vector<80x128xf32>, vector<128x128xf32>, vector<80x128xf32> -> vector<80x128xf32>
    %c0_34 = arith.constant 0 : index
    %c0_35 = arith.constant 0 : index
    %51 = vector.load %arg11[%c0_34, %c0_35] : memref<1x128xf32, #tpu.memory_space<vmem>>, vector<1x128xf32>
    %52 = vector.broadcast %51 : vector<1x128xf32> to vector<80x128xf32>
    %53 = arith.addf %50, %52 : vector<80x128xf32>
    %cst_36 = arith.constant 0.000000e+00 : f32
    %54 = vector.broadcast %cst_36 : f32 to vector<80x128xf32>
    %55 = arith.maximumf %53, %54 : vector<80x128xf32>
    %56 = arith.addf %48, %55 : vector<80x128xf32>
    %c0_37 = arith.constant 0 : index
    %c0_38 = arith.constant 0 : index
    %57 = vector.load %arg15[%c0_37, %c0_38] : memref<10x80xf32, #tpu.memory_space<vmem>>, vector<10x80xf32>
    %cst_39 = arith.constant dense<0.000000e+00> : vector<10x128xf32>
    %58 = tpu.matmul %57, %56, %cst_39 {dimension_numbers = #tpu.dot_dimension_numbers<[1], [0], [0], [1], [0, 0, 1, 1], [], []>} : vector<10x80xf32>, vector<80x128xf32>, vector<10x128xf32> -> vector<10x128xf32>
    %cst_40 = arith.constant dense<0.000000e+00> : vector<10xf32>
    %59 = vector.multi_reduction <add>, %58, %cst_40 [1] : vector<10x128xf32> to vector<10xf32>
    %60 = vector.shape_cast %59 : vector<10xf32> to vector<10x1xf32>
    %cst_41 = arith.constant 1.280000e+02 : f32
    %61 = vector.broadcast %cst_41 : f32 to vector<10x1xf32>
    %62 = arith.divf %60, %61 : vector<10x1xf32>
    %63 = vector.broadcast %62 : vector<10x1xf32> to vector<10x128xf32>
    %64 = arith.subf %58, %63 : vector<10x128xf32>
    %65 = arith.mulf %64, %64 : vector<10x128xf32>
    %cst_42 = arith.constant dense<0.000000e+00> : vector<10xf32>
    %66 = vector.multi_reduction <add>, %65, %cst_42 [1] : vector<10x128xf32> to vector<10xf32>
    %67 = vector.shape_cast %66 : vector<10xf32> to vector<10x1xf32>
    %cst_43 = arith.constant 1.280000e+02 : f32
    %68 = vector.broadcast %cst_43 : f32 to vector<10x1xf32>
    %69 = arith.divf %67, %68 : vector<10x1xf32>
    %70 = vector.broadcast %62 : vector<10x1xf32> to vector<10x128xf32>
    %71 = arith.subf %58, %70 : vector<10x128xf32>
    %cst_44 = arith.constant 9.99999974E-6 : f32
    %72 = vector.broadcast %cst_44 : f32 to vector<10x1xf32>
    %73 = arith.addf %69, %72 : vector<10x1xf32>
    %74 = math.rsqrt %73 : vector<10x1xf32>
    %75 = vector.broadcast %74 : vector<10x1xf32> to vector<10x128xf32>
    %76 = arith.mulf %71, %75 : vector<10x128xf32>
    %c0_45 = arith.constant 0 : index
    %c0_46 = arith.constant 0 : index
    %77 = vector.load %arg12[%c0_45, %c0_46] : memref<1x128xf32, #tpu.memory_space<vmem>>, vector<1x128xf32>
    %78 = vector.broadcast %77 : vector<1x128xf32> to vector<10x128xf32>
    %79 = arith.mulf %76, %78 : vector<10x128xf32>
    %c0_47 = arith.constant 0 : index
    %c0_48 = arith.constant 0 : index
    %80 = vector.load %arg13[%c0_47, %c0_48] : memref<1x128xf32, #tpu.memory_space<vmem>>, vector<1x128xf32>
    %81 = vector.broadcast %80 : vector<1x128xf32> to vector<10x128xf32>
    %82 = arith.addf %79, %81 : vector<10x128xf32>
    %c0_49 = arith.constant 0 : index
    %c0_50 = arith.constant 0 : index
    %83 = vector.load %arg14[%c0_49, %c0_50] : memref<128x128xf32, #tpu.memory_space<vmem>>, vector<128x128xf32>
    %cst_51 = arith.constant dense<0.000000e+00> : vector<10x128xf32>
    %84 = tpu.matmul %82, %83, %cst_51 {dimension_numbers = #tpu.dot_dimension_numbers<[1], [0], [0], [1], [0, 0, 1, 1], [], []>} : vector<10x128xf32>, vector<128x128xf32>, vector<10x128xf32> -> vector<10x128xf32>
    %85 = arith.mulf %84, %84 : vector<10x128xf32>
    %cst_52 = arith.constant dense<0.000000e+00> : vector<10xf32>
    %86 = vector.multi_reduction <add>, %85, %cst_52 [1] : vector<10x128xf32> to vector<10xf32>
    %87 = vector.shape_cast %86 : vector<10xf32> to vector<10x1xf32>
    %88 = math.rsqrt %87 : vector<10x1xf32>
    %89 = vector.broadcast %88 : vector<10x1xf32> to vector<10x128xf32>
    %90 = arith.mulf %84, %89 : vector<10x128xf32>
    %91 = vector.extract_strided_slice %90 {offsets = [0, 0], sizes = [5, 128], strides = [1, 1]} : vector<10x128xf32> to vector<5x128xf32>
    %92 = vector.extract_strided_slice %90 {offsets = [5, 0], sizes = [5, 128], strides = [1, 1]} : vector<10x128xf32> to vector<5x128xf32>
    %93 = arith.addf %91, %92 : vector<5x128xf32>
    %cst_53 = arith.constant 5.000000e-01 : f32
    %94 = vector.broadcast %cst_53 : f32 to vector<5x128xf32>
    %95 = arith.mulf %94, %93 : vector<5x128xf32>
    %c0_54 = arith.constant 0 : index
    %c0_55 = arith.constant 0 : index
    %96 = vector.load %arg17[%c0_54, %c0_55] : memref<5x128xf32, #tpu.memory_space<vmem>>, vector<5x128xf32>
    tpu.vector_store %arg17[%c0_54, %c0_55], %95 {strides = array<i32>} : memref<5x128xf32, #tpu.memory_space<vmem>>, vector<5x128xf32>,
    return
  }
}

</mosaic_0001>

<llo_original>
// kernel: tile.13
$region0: #{tile.13}
  #allocation0 [shape = 's32[1]{0}', space=sflag, size = 0x4, scoped, tag = 'scoped memory for tile.13']
  %s0 = inlined_call_operand.vmem [shape: f32[8], index: 0, kind: input, shape index: {}]
  %s1 = inlined_call_operand.vmem [shape: f32[10,8], index: 1, kind: output, shape index: {}]
  // Predicated region
  $region2: #{tile.13} parent=0 // pred_check
    _
  $region3: #{tile.13} parent=0 // pred_check_branch
    %3 = sbr.rel (0) target = $region5
  $region4: #{tile.13} parent=0 // pred_region
    _
  $region5: #{tile.13} parent=0 // pred_fallthru
    _
  %v4 = vld [vmem:[%s0] ss:$0 sm:$0xff]
  %5 = vst [vmem:[%s1] sm:$0xff] %v4
  %s6 = scalar_lea.vmem %s1, 8
  %7 = vst [vmem:[%s6] sm:$0xff] %v4

// kernel: tile.0
$region0: #{tile.0}
  %s0 = inlined_call_operand.vmem [shape: f32[10,8], index: 0, kind: input, shape index: {}]
  %s1 = inlined_call_operand.vmem [shape: f32[80,1], index: 1, kind: output, shape index: {}]
  %v2 = vld [vmem:[%s0] sm:$0xff]
  %vm3 = vcmask 7168
  %4 = vst.msk [vmem:[%s1] ss:$8 sm:$0xf] %vm3, %v2
  %5 = vst.msk [vmem:[%s1] ss:$8 sm:$0xf0] %vm3, %v2
  %s6 = scalar_lea.vmem %s0, 8
  %v7 = vld [vmem:[%s6] sm:$0x3]
  %vm8 = vcmask 7168
  %s9 = scalar_lea.vmem %s1, 64
  %10 = vst.msk [vmem:[%s9] ss:$8 sm:$0x3] %vm8, %v7
  %v11 = vld [vmem:[%s0] sm:$0xff]
  %12 = vrot.lane.b32.xlu0 %v11, 127
  %v13 = vpop.permute.xlu0 %12
  %vm14 = vcmask 7168
  %s15 = scalar_lea.vmem %s1, 1
  %16 = vst.msk [vmem:[%s15] ss:$8 sm:$0xf] %vm14, %v13
  %s17 = scalar_lea.vmem %s1, 1
  %18 = vst.msk [vmem:[%s17] ss:$8 sm:$0xf0] %vm14, %v13
  %s19 = scalar_lea.vmem %s0, 8
  %v20 = vld [vmem:[%s19] sm:$0x3]
  %21 = vrot.lane.b32.xlu0 %v20, 127
  %v22 = vpop.permute.xlu0 %21
  %vm23 = vcmask 7168
  %s24 = scalar_lea.vmem %s1, 65
  %25 = vst.msk [vmem:[%s24] ss:$8 sm:$0x3] %vm23, %v22
  %v26 = vld [vmem:[%s0] sm:$0xff]
  %27 = vrot.lane.b32.xlu0 %v26, 126
  %v28 = vpop.permute.xlu0 %27
  %vm29 = vcmask 7168
  %s30 = scalar_lea.vmem %s1, 2
  %31 = vst.msk [vmem:[%s30] ss:$8 sm:$0xf] %vm29, %v28
  %s32 = scalar_lea.vmem %s1, 2
  %33 = vst.msk [vmem:[%s32] ss:$8 sm:$0xf0] %vm29, %v28
  %s34 = scalar_lea.vmem %s0, 8
  %v35 = vld [vmem:[%s34] sm:$0x3]
  %36 = vrot.lane.b32.xlu0 %v35, 126
  %v37 = vpop.permute.xlu0 %36
  %vm38 = vcmask 7168
  %s39 = scalar_lea.vmem %s1, 66
  %40 = vst.msk [vmem:[%s39] ss:$8 sm:$0x3] %vm38, %v37
  %v41 = vld [vmem:[%s0] sm:$0xff]
  %42 = vrot.lane.b32.xlu0 %v41, 125
  %v43 = vpop.permute.xlu0 %42
  %vm44 = vcmask 7168
  %s45 = scalar_lea.vmem %s1, 3
  %46 = vst.msk [vmem:[%s45] ss:$8 sm:$0xf] %vm44, %v43
  %s47 = scalar_lea.vmem %s1, 3
  %48 = vst.msk [vmem:[%s47] ss:$8 sm:$0xf0] %vm44, %v43
  %s49 = scalar_lea.vmem %s0, 8
  %v50 = vld [vmem:[%s49] sm:$0x3]
  %51 = vrot.lane.b32.xlu0 %v50, 125
  %v52 = vpop.permute.xlu0 %51
  %vm53 = vcmask 7168
  %s54 = scalar_lea.vmem %s1, 67
  %55 = vst.msk [vmem:[%s54] ss:$8 sm:$0x3] %vm53, %v52
  %v56 = vld [vmem:[%s0] sm:$0xff]
  %57 = vrot.lane.b32.xlu0 %v56, 124
  %v58 = vpop.permute.xlu0 %57
  %vm59 = vcmask 7168
  %s60 = scalar_lea.vmem %s1, 4
  %61 = vst.msk [vmem:[%s60] ss:$8 sm:$0xf] %vm59, %v58
  %s62 = scalar_lea.vmem %s1, 4
  %63 = vst.msk [vmem:[%s62] ss:$8 sm:$0xf0] %vm59, %v58
  %s64 = scalar_lea.vmem %s0, 8
  %v65 = vld [vmem:[%s64] sm:$0x3]
  %66 = vrot.lane.b32.xlu0 %v65, 124
  %v67 = vpop.permute.xlu0 %66
  %vm68 = vcmask 7168
  %s69 = scalar_lea.vmem %s1, 68
  %70 = vst.msk [vmem:[%s69] ss:$8 sm:$0x3] %vm68, %v67
  %v71 = vld [vmem:[%s0] sm:$0xff]
  %72 = vrot.lane.b32.xlu0 %v71, 123
  %v73 = vpop.permute.xlu0 %72
  %vm74 = vcmask 7168
  %s75 = scalar_lea.vmem %s1, 5
  %76 = vst.msk [vmem:[%s75] ss:$8 sm:$0xf] %vm74, %v73
  %s77 = scalar_lea.vmem %s1, 5
  %78 = vst.msk [vmem:[%s77] ss:$8 sm:$0xf0] %vm74, %v73
  %s79 = scalar_lea.vmem %s0, 8
  %v80 = vld [vmem:[%s79] sm:$0x3]
  %81 = vrot.lane.b32.xlu0 %v80, 123
  %v82 = vpop.permute.xlu0 %81
  %vm83 = vcmask 7168
  %s84 = scalar_lea.vmem %s1, 69
  %85 = vst.msk [vmem:[%s84] ss:$8 sm:$0x3] %vm83, %v82
  %v86 = vld [vmem:[%s0] sm:$0xff]
  %87 = vrot.lane.b32.xlu0 %v86, 122
  %v88 = vpop.permute.xlu0 %87
  %vm89 = vcmask 7168
  %s90 = scalar_lea.vmem %s1, 6
  %91 = vst.msk [vmem:[%s90] ss:$8 sm:$0xf] %vm89, %v88
  %s92 = scalar_lea.vmem %s1, 6
  %93 = vst.msk [vmem:[%s92] ss:$8 sm:$0xf0] %vm89, %v88
  %s94 = scalar_lea.vmem %s0, 8
  %v95 = vld [vmem:[%s94] sm:$0x3]
  %96 = vrot.lane.b32.xlu0 %v95, 122
  %v97 = vpop.permute.xlu0 %96
  %vm98 = vcmask 7168
  %s99 = scalar_lea.vmem %s1, 70
  %100 = vst.msk [vmem:[%s99] ss:$8 sm:$0x3] %vm98, %v97
  %v101 = vld [vmem:[%s0] sm:$0xff]
  %102 = vrot.lane.b32.xlu0 %v101, 121
  %v103 = vpop.permute.xlu0 %102
  %vm104 = vcmask 7168
  %s105 = scalar_lea.vmem %s1, 7
  %106 = vst.msk [vmem:[%s105] ss:$8 sm:$0xf] %vm104, %v103
  %s107 = scalar_lea.vmem %s1, 7
  %108 = vst.msk [vmem:[%s107] ss:$8 sm:$0xf0] %vm104, %v103
  %s109 = scalar_lea.vmem %s0, 8
  %v110 = vld [vmem:[%s109] sm:$0x3]
  %111 = vrot.lane.b32.xlu0 %v110, 121
  %v112 = vpop.permute.xlu0 %111
  %vm113 = vcmask 7168
  %s114 = scalar_lea.vmem %s1, 71
  %115 = vst.msk [vmem:[%s114] ss:$8 sm:$0x3] %vm113, %v112

// kernel: eclip_forward.1
$region0: #{eclip_forward.1}
  #allocation0 [shape = 'u32[]', space=smem, size = 0x4, offset = 0x4, fixed_abs, tag = 'smem constant byte address 0x4 - core index']
  #allocation1 [shape = 'u32[144,128]{1,0:T(1,128)}', space=vmem, size = 0x12000, scoped, tag = 'internal scratch']
  %s0 = inlined_call_operand.vmem [shape: s32[2,1], index: 0, kind: input, shape index: {}]
  %s1 = inlined_call_operand.vmem [shape: f32[2,4,16,128], index: 1, kind: input, shape index: {}]
  %s2 = inlined_call_operand.vmem [shape: f32[128,128], index: 2, kind: input, shape index: {}]
  %s3 = inlined_call_operand.vmem [shape: f32[1,128], index: 3, kind: input, shape index: {}]
  %s4 = inlined_call_operand.vmem [shape: f32[128,128], index: 4, kind: input, shape index: {}]
  %s5 = inlined_call_operand.vmem [shape: f32[1,128], index: 5, kind: input, shape index: {}]
  %s6 = inlined_call_operand.vmem [shape: f32[128,128], index: 6, kind: input, shape index: {}]
  %s7 = inlined_call_operand.vmem [shape: f32[1,128], index: 7, kind: input, shape index: {}]
  %s8 = inlined_call_operand.vmem [shape: f32[80,128], index: 8, kind: input, shape index: {}]
  %s9 = inlined_call_operand.vmem [shape: f32[80,1], index: 9, kind: input, shape index: {}]
  %s10 = inlined_call_operand.vmem [shape: f32[128,128], index: 10, kind: input, shape index: {}]
  %s11 = inlined_call_operand.vmem [shape: f32[1,128], index: 11, kind: input, shape index: {}]
  %s12 = inlined_call_operand.vmem [shape: f32[1,128], index: 12, kind: input, shape index: {}]
  %s13 = inlined_call_operand.vmem [shape: f32[1,128], index: 13, kind: input, shape index: {}]
  %s14 = inlined_call_operand.vmem [shape: f32[128,128], index: 14, kind: input, shape index: {}]
  %s15 = inlined_call_operand.vmem [shape: f32[10,80], index: 15, kind: input, shape index: {}]
  %s16 = inlined_call_operand.hbm [shape: f32[2,128], index: 16, kind: output, shape index: {0}]
  %s17 = inlined_call_operand.hbm [shape: f32[5,128], index: 17, kind: output, shape index: {1}]
  %18 = xla_tuple %s16, %s17
  %s19 = sld [smem:[#allocation0]]
  $region82: #{eclip_forward.1} parent=0
    _
  %s21 = ssub.s32 1, %s19
  %s22 = scalar_select 0, %s21, %s19
  $region1: #{eclip_forward.1} parent=0
    #allocation2 [shape = 'u8[1024]{0}', space=vmem, size = 0x400, scoped, tag = 'output window, operand 0, single buffered']
    #allocation3 [shape = 's32[1]{0}', space=sflag, size = 0x4, scoped, tag = 'scoped memory for eclip_forward.1']
    #allocation4 [shape = 'u8[4096]{0}', space=vmem, size = 0x1000, scoped, tag = 'output window, operand 1, single buffered']
    #allocation5 [shape = 's32[1]{0}', space=sflag, size = 0x4, scoped, tag = 'scoped memory for eclip_forward.1']
    %23 = vsyncpa [#allocation3], 0
    %24 = vsyncpa [#allocation5], 0
    // Predicated region
    $region2: #{eclip_forward.1} parent=1 // pred_check
      _
    $region3: #{eclip_forward.1} parent=1 // pred_check_branch
      %26 = sbr.rel (0) target = $region5
    $region4: #{eclip_forward.1} parent=1 // pred_region
      _
    $region5: #{eclip_forward.1} parent=1 // pred_fallthru
      _
    // Predicated region
    $region6: #{eclip_forward.1} parent=1 // pred_check
      _
    $region7: #{eclip_forward.1} parent=1 // pred_check_branch
      %28 = sbr.rel (0) target = $region9
    $region8: #{eclip_forward.1} parent=1 // pred_region
      _
    $region9: #{eclip_forward.1} parent=1 // pred_fallthru
      _
    // Predicated region
    $region10: #{eclip_forward.1} parent=1 // pred_check
      _
    $region11: #{eclip_forward.1} parent=1 // pred_check_branch
      %30 = sbr.rel (0) target = $region13
    $region12: #{eclip_forward.1} parent=1 // pred_region
      _
    $region13: #{eclip_forward.1} parent=1 // pred_fallthru
      _
    // Predicated region
    $region14: #{eclip_forward.1} parent=1 // pred_check
      _
    $region15: #{eclip_forward.1} parent=1 // pred_check_branch
      %32 = sbr.rel (0) target = $region17
    $region16: #{eclip_forward.1} parent=1 // pred_region
      _
    $region17: #{eclip_forward.1} parent=1 // pred_fallthru
      _
    // Predicated region
    $region18: #{eclip_forward.1} parent=1 // pred_check
      _
    $region19: #{eclip_forward.1} parent=1 // pred_check_branch
      %34 = sbr.rel (0) target = $region21
    $region20: #{eclip_forward.1} parent=1 // pred_region
      _
    $region21: #{eclip_forward.1} parent=1 // pred_fallthru
      _
    // Predicated region
    $region22: #{eclip_forward.1} parent=1 // pred_check
      _
    $region23: #{eclip_forward.1} parent=1 // pred_check_branch
      %36 = sbr.rel (0) target = $region25
    $region24: #{eclip_forward.1} parent=1 // pred_region
      _
    $region25: #{eclip_forward.1} parent=1 // pred_fallthru
      _
    // Predicated region
    $region26: #{eclip_forward.1} parent=1 // pred_check
      _
    $region27: #{eclip_forward.1} parent=1 // pred_check_branch
      %38 = sbr.rel (0) target = $region29
    $region28: #{eclip_forward.1} parent=1 // pred_region
      _
    $region29: #{eclip_forward.1} parent=1 // pred_fallthru
      _
    // Predicated region
    $region30: #{eclip_forward.1} parent=1 // pred_check
      _
    $region31: #{eclip_forward.1} parent=1 // pred_check_branch
      %40 = sbr.rel (0) target = $region33
    $region32: #{eclip_forward.1} parent=1 // pred_region
      _
    $region33: #{eclip_forward.1} parent=1 // pred_fallthru
      _
    // Predicated region
    $region34: #{eclip_forward.1} parent=1 // pred_check
      _
    $region35: #{eclip_forward.1} parent=1 // pred_check_branch
      %42 = sbr.rel (0) target = $region37
    $region36: #{eclip_forward.1} parent=1 // pred_region
      _
    $region37: #{eclip_forward.1} parent=1 // pred_fallthru
      _
    // Predicated region
    $region38: #{eclip_forward.1} parent=1 // pred_check
      _
    $region39: #{eclip_forward.1} parent=1 // pred_check_branch
      %44 = sbr.rel (0) target = $region41
    $region40: #{eclip_forward.1} parent=1 // pred_region
      _
    $region41: #{eclip_forward.1} parent=1 // pred_fallthru
      _
    // Predicated region
    $region42: #{eclip_forward.1} parent=1 // pred_check
      _
    $region43: #{eclip_forward.1} parent=1 // pred_check_branch
      %46 = sbr.rel (0) target = $region45
    $region44: #{eclip_forward.1} parent=1 // pred_region
      _
    $region45: #{eclip_forward.1} parent=1 // pred_fallthru
      _
    // Predicated region
    $region46: #{eclip_forward.1} parent=1 // pred_check
      _
    $region47: #{eclip_forward.1} parent=1 // pred_check_branch
      %48 = sbr.rel (0) target = $region49
    $region48: #{eclip_forward.1} parent=1 // pred_region
      _
    $region49: #{eclip_forward.1} parent=1 // pred_fallthru
      _
    // Predicated region
    $region50: #{eclip_forward.1} parent=1 // pred_check
      _
    $region51: #{eclip_forward.1} parent=1 // pred_check_branch
      %50 = sbr.rel (0) target = $region53
    $region52: #{eclip_forward.1} parent=1 // pred_region
      _
    $region53: #{eclip_forward.1} parent=1 // pred_fallthru
      _
    // Predicated region
    $region54: #{eclip_forward.1} parent=1 // pred_check
      _
    $region55: #{eclip_forward.1} parent=1 // pred_check_branch
      %52 = sbr.rel (0) target = $region57
    $region56: #{eclip_forward.1} parent=1 // pred_region
      _
    $region57: #{eclip_forward.1} parent=1 // pred_fallthru
      _
    // Predicated region
    $region58: #{eclip_forward.1} parent=1 // pred_check
      _
    $region59: #{eclip_forward.1} parent=1 // pred_check_branch
      %54 = sbr.rel (0) target = $region61
    $region60: #{eclip_forward.1} parent=1 // pred_region
      _
    $region61: #{eclip_forward.1} parent=1 // pred_fallthru
      _
    // Predicated region
    $region62: #{eclip_forward.1} parent=1 // pred_check
      _
    $region63: #{eclip_forward.1} parent=1 // pred_check_branch
      %56 = sbr.rel (0) target = $region65
    $region64: #{eclip_forward.1} parent=1 // pred_region
      _
    $region65: #{eclip_forward.1} parent=1 // pred_fallthru
      _
    %v57 = vld [vmem:[%s1] sm:$0xff]
    %v58 = vld [vmem:[%s1 + $0x8] sm:$0xff]
    %v59 = vld [vmem:[%s1 + $0x10] sm:$0xff]
    %v60 = vld [vmem:[%s1 + $0x18] sm:$0xff]
    %v61 = vld [vmem:[%s1 + $0x20] sm:$0xff]
    %v62 = vld [vmem:[%s1 + $0x28] sm:$0xff]
    %v63 = vld [vmem:[%s1 + $0x30] sm:$0xff]
    %v64 = vld [vmem:[%s1 + $0x38] sm:$0xff]
    %v65 = vld [vmem:[%s1 + $0x40] sm:$0xff]
    %v66 = vld [vmem:[%s1 + $0x48] sm:$0xff]
    %v67 = vld [vmem:[%s1 + $0x50] sm:$0xff]
    %v68 = vld [vmem:[%s1 + $0x58] sm:$0xff]
    %v69 = vld [vmem:[%s1 + $0x60] sm:$0xff]
    %v70 = vld [vmem:[%s1 + $0x68] sm:$0xff]
    %v71 = vld [vmem:[%s1 + $0x70] sm:$0xff]
    %v72 = vld [vmem:[%s1 + $0x78] sm:$0xff]
    %v73 = vadd.f32 %v57, %v58
    %v74 = vrot.slane %v73, 4
    %v75 = vadd.f32 %v73, %v74
    %v76 = vrot.slane %v75, 2
    %v77 = vadd.f32 %v75, %v76
    %v78 = vrot.slane %v77, 1
    %v79 = vadd.f32 %v77, %v78
    %v80 = vadd.f32 %v59, %v60
    %v81 = vrot.slane %v80, 4
    %v82 = vadd.f32 %v80, %v81
    %v83 = vrot.slane %v82, 2
    %v84 = vadd.f32 %v82, %v83
    %v85 = vrot.slane %v84, 1
    %v86 = vadd.f32 %v84, %v85
    %v87 = vadd.f32 %v61, %v62
    %v88 = vrot.slane %v87, 4
    %v89 = vadd.f32 %v87, %v88
    %v90 = vrot.slane %v89, 2
    %v91 = vadd.f32 %v89, %v90
    %v92 = vrot.slane %v91, 1
    %v93 = vadd.f32 %v91, %v92
    %v94 = vadd.f32 %v63, %v64
    %v95 = vrot.slane %v94, 4
    %v96 = vadd.f32 %v94, %v95
    %v97 = vrot.slane %v96, 2
    %v98 = vadd.f32 %v96, %v97
    %v99 = vrot.slane %v98, 1
    %v100 = vadd.f32 %v98, %v99
    %v101 = vadd.f32 %v65, %v66
    %v102 = vrot.slane %v101, 4
    %v103 = vadd.f32 %v101, %v102
    %v104 = vrot.slane %v103, 2
    %v105 = vadd.f32 %v103, %v104
    %v106 = vrot.slane %v105, 1
    %v107 = vadd.f32 %v105, %v106
    %v108 = vadd.f32 %v67, %v68
    %v109 = vrot.slane %v108, 4
    %v110 = vadd.f32 %v108, %v109
    %v111 = vrot.slane %v110, 2
    %v112 = vadd.f32 %v110, %v111
    %v113 = vrot.slane %v112, 1
    %v114 = vadd.f32 %v112, %v113
    %v115 = vadd.f32 %v69, %v70
    %v116 = vrot.slane %v115, 4
    %v117 = vadd.f32 %v115, %v116
    %v118 = vrot.slane %v117, 2
    %v119 = vadd.f32 %v117, %v118
    %v120 = vrot.slane %v119, 1
    %v121 = vadd.f32 %v119, %v120
    %v122 = vadd.f32 %v71, %v72
    %v123 = vrot.slane %v122, 4
    %v124 = vadd.f32 %v122, %v123
    %v125 = vrot.slane %v124, 2
    %v126 = vadd.f32 %v124, %v125
    %v127 = vrot.slane %v126, 1
    %v128 = vadd.f32 %v126, %v127
    %v129 = vld [vmem:[%s0] sm:$0x3]
    %v130 = vlaneseq
    %v131 = vand.u32 %v130, 127
    %132 = vset.pattern.permute.xlu0 0
    %133 = vperm.xlu0 %132, %v129
    %v134 = vpop.permute.xlu0 %133
    %vm135 = vcmp.lt.s32.totalorder %v131, %v134
    %v136 = vsel %vm135, 1, 0
    %v137 = vcvt.s32.f32 %v136
    %v138 = vcvt.s32.f32 %v129
    %v139 = vmax.f32 %v138, 1.0
    %v140 = vmul.f32 %v139, 16.0
    %v141 = vrcp.pop %v140
    %143 = vset.pattern.permute.xlu0 0
    %144 = vperm.xlu0 %143, %v141
    %v145 = vpop.permute.xlu0 %144
    %v147 = vmul.f32 %v137, %v145
    %v148 = vlaneseq
    %v149 = vshrl.u32 %v148, 7
    %v150 = vsub.s32 0, %v149
    %v151 = vrot.slane %v147, %v150
    %153 = vbcast.lane.b32.xlu0 %v151, 256
    %v154 = vpop.permute.xlu0 %153
    %v155 = vlaneseq
    %v156 = vshrl.u32 %v155, 7
    %v157 = vsub.s32 1, %v156
    %v158 = vrot.slane %v147, %v157
    %160 = vbcast.lane.b32.xlu0 %v158, 256
    %v161 = vpop.permute.xlu0 %160
    %v164 = vrot.slane %v154, 1
    %v165 = vrot.slane %v154, 2
    %v166 = vrot.slane %v154, 3
    %v167 = vrot.slane %v161, 1
    %v168 = vrot.slane %v161, 2
    %v169 = vrot.slane %v161, 3
    %v178 = vmul.f32 %v79, %v154
    %v179 = vmul.f32 %v86, %v164
    %v180 = vmul.f32 %v93, %v165
    %v181 = vmul.f32 %v100, %v166
    %v182 = vmul.f32 %v107, %v161
    %v183 = vmul.f32 %v114, %v167
    %v184 = vmul.f32 %v121, %v168
    %v185 = vmul.f32 %v128, %v169
    %v194 = vrot.slane %v179, 7
    %vm195 = vcmask 1041409
    %v196 = vsel %vm195, %v194, %v178
    %v197 = vrot.slane %v180, 6
    %vm198 = vcmask 1042434
    %v199 = vsel %vm198, %v197, %v196
    %v200 = vrot.slane %v181, 5
    %vm201 = vcmask 1043459
    %v202 = vsel %vm201, %v200, %v199
    %v203 = vrot.slane %v183, 7
    %v204 = vsel %vm195, %v203, %v182
    %v205 = vrot.slane %v184, 6
    %v206 = vsel %vm198, %v205, %v204
    %v207 = vrot.slane %v185, 5
    %v208 = vsel %vm201, %v207, %v206
    %vm211 = vcmask 1043456
    %v212 = vsel %vm211, %v202, 0.0
    %v213 = vrot.slane %v212, 4
    %v214 = vadd.f32 %v212, %v213
    %v215 = vrot.slane %v214, 2
    %v216 = vadd.f32 %v214, %v215
    %v217 = vrot.slane %v216, 1
    %v218 = vadd.f32 %v216, %v217
    %v219 = vsel %vm211, %v208, 0.0
    %v220 = vrot.slane %v219, 4
    %v221 = vadd.f32 %v219, %v220
    %v222 = vrot.slane %v221, 2
    %v223 = vadd.f32 %v221, %v222
    %v224 = vrot.slane %v223, 1
    %v225 = vadd.f32 %v223, %v224
    %v226 = vld [vmem:[%s2] sm:$0xff]
    %v227 = vld [vmem:[%s2 + $0x8] sm:$0xff]
    %v228 = vld [vmem:[%s2 + $0x10] sm:$0xff]
    %v229 = vld [vmem:[%s2 + $0x18] sm:$0xff]
    %v230 = vld [vmem:[%s2 + $0x20] sm:$0xff]
    %v231 = vld [vmem:[%s2 + $0x28] sm:$0xff]
    %v232 = vld [vmem:[%s2 + $0x30] sm:$0xff]
    %v233 = vld [vmem:[%s2 + $0x38] sm:$0xff]
    %v234 = vld [vmem:[%s2 + $0x40] sm:$0xff]
    %v235 = vld [vmem:[%s2 + $0x48] sm:$0xff]
    %v236 = vld [vmem:[%s2 + $0x50] sm:$0xff]
    %v237 = vld [vmem:[%s2 + $0x58] sm:$0xff]
    %v238 = vld [vmem:[%s2 + $0x60] sm:$0xff]
    %v239 = vld [vmem:[%s2 + $0x68] sm:$0xff]
    %v240 = vld [vmem:[%s2 + $0x70] sm:$0xff]
    %v241 = vld [vmem:[%s2 + $0x78] sm:$0xff]
    %v242 = vld [vmem:[%s3] sm:$0x1]
    %v244 = vlaneseq
    %v245 = vshrl.u32 %v244, 7
    %v246 = vsub.s32 0, %v245
    %v247 = vrot.slane %v242, %v246
    %v251 = vrot.slane %v225, 7
    %v252 = vsel %vm195, %v251, %v218
    %254 = vmatprep.subr.mxu0 0.0
    %255 = vmatpush1.msra.mxu0 %v226
    %256 = vmatprep.subr.mxu0 0.0
    %257 = vmatpush1.msra.mxu0 %v227
    %258 = vmatprep.subr.mxu0 0.0
    %259 = vmatpush1.msra.mxu0 %v228
    %260 = vmatprep.subr.mxu0 0.0
    %261 = vmatpush1.msra.mxu0 %v229
    %262 = vmatprep.subr.mxu0 0.0
    %263 = vmatpush1.msra.mxu0 %v230
    %264 = vmatprep.subr.mxu0 0.0
    %265 = vmatpush1.msra.mxu0 %v231
    %266 = vmatprep.subr.mxu0 0.0
    %267 = vmatpush1.msra.mxu0 %v232
    %268 = vmatprep.subr.mxu0 0.0
    %269 = vmatpush1.msra.mxu0 %v233
    %270 = vmatprep.subr.mxu0 0.0
    %271 = vmatpush1.msra.mxu0 %v234
    %272 = vmatprep.subr.mxu0 0.0
    %273 = vmatpush1.msra.mxu0 %v235
    %274 = vmatprep.subr.mxu0 0.0
    %275 = vmatpush1.msra.mxu0 %v236
    %276 = vmatprep.subr.mxu0 0.0
    %277 = vmatpush1.msra.mxu0 %v237
    %278 = vmatprep.subr.mxu0 0.0
    %279 = vmatpush1.msra.mxu0 %v238
    %280 = vmatprep.subr.mxu0 0.0
    %281 = vmatpush1.msra.mxu0 %v239
    %282 = vmatprep.subr.mxu0 0.0
    %283 = vmatpush1.msra.mxu0 %v240
    %284 = vmatprep.subr.mxu0 0.0
    %285 = vmatpush1.msra.mxu0 %v241
    %286 = vmatprep.subr.mxu0 0.0
    %287 = vmatpush1.msra.mxu0 0.0
    %288 = vmatprep.subr.mxu0 0.0
    %289 = vmatpush1.msra.mxu0 0.0
    %290 = vmatprep.subr.mxu0 0.0
    %291 = vmatpush1.msra.mxu0 0.0
    %292 = vmatprep.subr.mxu0 0.0
    %293 = vmatpush1.msra.mxu0 0.0
    %294 = vmatprep.subr.mxu0 0.0
    %295 = vmatpush1.msra.mxu0 0.0
    %296 = vmatprep.subr.mxu0 0.0
    %297 = vmatpush1.msra.mxu0 0.0
    %298 = vmatprep.subr.mxu0 0.0
    %299 = vmatpush1.msra.mxu0 0.0
    %300 = vmatprep.subr.mxu0 0.0
    %301 = vmatpush1.msra.mxu0 0.0
    %302 = vmatprep.subr.mxu0 0.0
    %303 = vmatpush1.msra.mxu0 0.0
    %304 = vmatprep.subr.mxu0 0.0
    %305 = vmatpush1.msra.mxu0 0.0
    %306 = vmatprep.subr.mxu0 0.0
    %307 = vmatpush1.msra.mxu0 0.0
    %308 = vmatprep.subr.mxu0 0.0
    %309 = vmatpush1.msra.mxu0 0.0
    %310 = vmatprep.subr.mxu0 0.0
    %311 = vmatpush1.msra.mxu0 0.0
    %312 = vmatprep.subr.mxu0 0.0
    %313 = vmatpush1.msra.mxu0 0.0
    %314 = vmatprep.subr.mxu0 0.0
    %315 = vmatpush1.msra.mxu0 0.0
    %316 = vmatprep.subr.mxu0 0.0
    %317 = vmatpush1.msra.mxu0 0.0
    %318 = vmatprep.mubr.f32.mxu0 0.0
    %319 = vmatmul.mubr.f32.gmra.mrb[0].mxu0 %v252
    %v320 = vpop.f32.mrb[0].mxu0
    %v321 = vadd.f32 %v247, %v320
    %v322 = vpop.f32.mrb[0].mxu0
    %323 = vdwg.mxu0
    %v324 = vmul.f32 %v321, %v321
    %vm325 = vcmask 1041408
    %v326 = vsel %vm325, %v324, 0.0
    %327 = vadd.xlane.f32.xlu0 %v326
    %v328 = vpop.xlane.xlu0 %327
    %v329 = vrsqrt.pop %v328
    %v330 = vmul.f32 %v321, %v329
    %331 = vst [vmem:[#allocation2] sm:$0x3] %v330
    %v332 = vld [vmem:[%s4] sm:$0xff]
    %v333 = vld [vmem:[%s4 + $0x8] sm:$0xff]
    %v334 = vld [vmem:[%s4 + $0x10] sm:$0xff]
    %v335 = vld [vmem:[%s4 + $0x18] sm:$0xff]
    %v336 = vld [vmem:[%s4 + $0x20] sm:$0xff]
    %v337 = vld [vmem:[%s4 + $0x28] sm:$0xff]
    %v338 = vld [vmem:[%s4 + $0x30] sm:$0xff]
    %v339 = vld [vmem:[%s4 + $0x38] sm:$0xff]
    %v340 = vld [vmem:[%s4 + $0x40] sm:$0xff]
    %v341 = vld [vmem:[%s4 + $0x48] sm:$0xff]
    %v342 = vld [vmem:[%s4 + $0x50] sm:$0xff]
    %v343 = vld [vmem:[%s4 + $0x58] sm:$0xff]
    %v344 = vld [vmem:[%s4 + $0x60] sm:$0xff]
    %v345 = vld [vmem:[%s4 + $0x68] sm:$0xff]
    %v346 = vld [vmem:[%s4 + $0x70] sm:$0xff]
    %v347 = vld [vmem:[%s4 + $0x78] sm:$0xff]
    %v348 = vld [vmem:[%s5] sm:$0x1]
    %349 = vmatprep.subr.mxu0 0.0
    %350 = vmatpush1.msra.mxu0 %v332
    %351 = vmatprep.subr.mxu0 0.0
    %352 = vmatpush1.msra.mxu0 %v333
    %353 = vmatprep.subr.mxu0 0.0
    %354 = vmatpush1.msra.mxu0 %v334
    %355 = vmatprep.subr.mxu0 0.0
    %356 = vmatpush1.msra.mxu0 %v335
    %357 = vmatprep.subr.mxu0 0.0
    %358 = vmatpush1.msra.mxu0 %v336
    %359 = vmatprep.subr.mxu0 0.0
    %360 = vmatpush1.msra.mxu0 %v337
    %361 = vmatprep.subr.mxu0 0.0
    %362 = vmatpush1.msra.mxu0 %v338
    %363 = vmatprep.subr.mxu0 0.0
    %364 = vmatpush1.msra.mxu0 %v339
    %365 = vmatprep.subr.mxu0 0.0
    %366 = vmatpush1.msra.mxu0 %v340
    %367 = vmatprep.subr.mxu0 0.0
    %368 = vmatpush1.msra.mxu0 %v341
    %369 = vmatprep.subr.mxu0 0.0
    %370 = vmatpush1.msra.mxu0 %v342
    %371 = vmatprep.subr.mxu0 0.0
    %372 = vmatpush1.msra.mxu0 %v343
    %373 = vmatprep.subr.mxu0 0.0
    %374 = vmatpush1.msra.mxu0 %v344
    %375 = vmatprep.subr.mxu0 0.0
    %376 = vmatpush1.msra.mxu0 %v345
    %377 = vmatprep.subr.mxu0 0.0
    %378 = vmatpush1.msra.mxu0 %v346
    %379 = vmatprep.subr.mxu0 0.0
    %380 = vmatpush1.msra.mxu0 %v347
    %381 = vmatprep.subr.mxu0 0.0
    %382 = vmatpush1.msra.mxu0 0.0
    %383 = vmatprep.subr.mxu0 0.0
    %384 = vmatpush1.msra.mxu0 0.0
    %385 = vmatprep.subr.mxu0 0.0
    %386 = vmatpush1.msra.mxu0 0.0
    %387 = vmatprep.subr.mxu0 0.0
    %388 = vmatpush1.msra.mxu0 0.0
    %389 = vmatprep.subr.mxu0 0.0
    %390 = vmatpush1.msra.mxu0 0.0
    %391 = vmatprep.subr.mxu0 0.0
    %392 = vmatpush1.msra.mxu0 0.0
    %393 = vmatprep.subr.mxu0 0.0
    %394 = vmatpush1.msra.mxu0 0.0
    %395 = vmatprep.subr.mxu0 0.0
    %396 = vmatpush1.msra.mxu0 0.0
    %397 = vmatprep.subr.mxu0 0.0
    %398 = vmatpush1.msra.mxu0 0.0
    %399 = vmatprep.subr.mxu0 0.0
    %400 = vmatpush1.msra.mxu0 0.0
    %401 = vmatprep.subr.mxu0 0.0
    %402 = vmatpush1.msra.mxu0 0.0
    %403 = vmatprep.subr.mxu0 0.0
    %404 = vmatpush1.msra.mxu0 0.0
    %405 = vmatprep.subr.mxu0 0.0
    %406 = vmatpush1.msra.mxu0 0.0
    %407 = vmatprep.subr.mxu0 0.0
    %408 = vmatpush1.msra.mxu0 0.0
    %409 = vmatprep.subr.mxu0 0.0
    %410 = vmatpush1.msra.mxu0 0.0
    %411 = vmatprep.subr.mxu0 0.0
    %412 = vmatpush1.msra.mxu0 0.0
    %413 = vmatprep.mubr.f32.mxu0 0.0
    %414 = vmatmul.mubr.f32.gmra.mrb[0].mxu0 %v330
    %v415 = vpop.f32.mrb[0].mxu0
    %v416 = vadd.f32 %v348, %v415
    %v417 = vpop.f32.mrb[0].mxu0
    %418 = vdwg.mxu0
    %v419 = vmax.f32 %v416, 0.0
    %v420 = vld [vmem:[%s6] sm:$0xff]
    %v421 = vld [vmem:[%s6 + $0x8] sm:$0xff]
    %v422 = vld [vmem:[%s6 + $0x10] sm:$0xff]
    %v423 = vld [vmem:[%s6 + $0x18] sm:$0xff]
    %v424 = vld [vmem:[%s6 + $0x20] sm:$0xff]
    %v425 = vld [vmem:[%s6 + $0x28] sm:$0xff]
    %v426 = vld [vmem:[%s6 + $0x30] sm:$0xff]
    %v427 = vld [vmem:[%s6 + $0x38] sm:$0xff]
    %v428 = vld [vmem:[%s6 + $0x40] sm:$0xff]
    %v429 = vld [vmem:[%s6 + $0x48] sm:$0xff]
    %v430 = vld [vmem:[%s6 + $0x50] sm:$0xff]
    %v431 = vld [vmem:[%s6 + $0x58] sm:$0xff]
    %v432 = vld [vmem:[%s6 + $0x60] sm:$0xff]
    %v433 = vld [vmem:[%s6 + $0x68] sm:$0xff]
    %v434 = vld [vmem:[%s6 + $0x70] sm:$0xff]
    %v435 = vld [vmem:[%s6 + $0x78] sm:$0xff]
    %v436 = vld [vmem:[%s7] sm:$0x1]
    %437 = vmatprep.subr.mxu0 0.0
    %438 = vmatpush1.msra.mxu0 %v420
    %439 = vmatprep.subr.mxu0 0.0
    %440 = vmatpush1.msra.mxu0 %v421
    %441 = vmatprep.subr.mxu0 0.0
    %442 = vmatpush1.msra.mxu0 %v422
    %443 = vmatprep.subr.mxu0 0.0
    %444 = vmatpush1.msra.mxu0 %v423
    %445 = vmatprep.subr.mxu0 0.0
    %446 = vmatpush1.msra.mxu0 %v424
    %447 = vmatprep.subr.mxu0 0.0
    %448 = vmatpush1.msra.mxu0 %v425
    %449 = vmatprep.subr.mxu0 0.0
    %450 = vmatpush1.msra.mxu0 %v426
    %451 = vmatprep.subr.mxu0 0.0
    %452 = vmatpush1.msra.mxu0 %v427
    %453 = vmatprep.subr.mxu0 0.0
    %454 = vmatpush1.msra.mxu0 %v428
    %455 = vmatprep.subr.mxu0 0.0
    %456 = vmatpush1.msra.mxu0 %v429
    %457 = vmatprep.subr.mxu0 0.0
    %458 = vmatpush1.msra.mxu0 %v430
    %459 = vmatprep.subr.mxu0 0.0
    %460 = vmatpush1.msra.mxu0 %v431
    %461 = vmatprep.subr.mxu0 0.0
    %462 = vmatpush1.msra.mxu0 %v432
    %463 = vmatprep.subr.mxu0 0.0
    %464 = vmatpush1.msra.mxu0 %v433
    %465 = vmatprep.subr.mxu0 0.0
    %466 = vmatpush1.msra.mxu0 %v434
    %467 = vmatprep.subr.mxu0 0.0
    %468 = vmatpush1.msra.mxu0 %v435
    %469 = vmatprep.subr.mxu0 0.0
    %470 = vmatpush1.msra.mxu0 0.0
    %471 = vmatprep.subr.mxu0 0.0
    %472 = vmatpush1.msra.mxu0 0.0
    %473 = vmatprep.subr.mxu0 0.0
    %474 = vmatpush1.msra.mxu0 0.0
    %475 = vmatprep.subr.mxu0 0.0
    %476 = vmatpush1.msra.mxu0 0.0
    %477 = vmatprep.subr.mxu0 0.0
    %478 = vmatpush1.msra.mxu0 0.0
    %479 = vmatprep.subr.mxu0 0.0
    %480 = vmatpush1.msra.mxu0 0.0
    %481 = vmatprep.subr.mxu0 0.0
    %482 = vmatpush1.msra.mxu0 0.0
    %483 = vmatprep.subr.mxu0 0.0
    %484 = vmatpush1.msra.mxu0 0.0
    %485 = vmatprep.subr.mxu0 0.0
    %486 = vmatpush1.msra.mxu0 0.0
    %487 = vmatprep.subr.mxu0 0.0
    %488 = vmatpush1.msra.mxu0 0.0
    %489 = vmatprep.subr.mxu0 0.0
    %490 = vmatpush1.msra.mxu0 0.0
    %491 = vmatprep.subr.mxu0 0.0
    %492 = vmatpush1.msra.mxu0 0.0
    %493 = vmatprep.subr.mxu0 0.0
    %494 = vmatpush1.msra.mxu0 0.0
    %495 = vmatprep.subr.mxu0 0.0
    %496 = vmatpush1.msra.mxu0 0.0
    %497 = vmatprep.subr.mxu0 0.0
    %498 = vmatpush1.msra.mxu0 0.0
    %499 = vmatprep.subr.mxu0 0.0
    %500 = vmatpush1.msra.mxu0 0.0
    %501 = vmatprep.mubr.f32.mxu0 0.0
    %502 = vmatmul.mubr.f32.gmra.mrb[0].mxu0 %v419
    %v503 = vpop.f32.mrb[0].mxu0
    %v504 = vadd.f32 %v436, %v503
    %v505 = vpop.f32.mrb[0].mxu0
    %506 = vdwg.mxu0
    %v507 = vld [vmem:[%s8] sm:$0xff]
    %v508 = vld [vmem:[%s8 + $0x8] sm:$0xff]
    %v509 = vld [vmem:[%s8 + $0x10] sm:$0xff]
    %v510 = vld [vmem:[%s8 + $0x18] sm:$0xff]
    %v511 = vld [vmem:[%s8 + $0x20] sm:$0xff]
    %v512 = vld [vmem:[%s8 + $0x28] sm:$0xff]
    %v513 = vld [vmem:[%s8 + $0x30] sm:$0xff]
    %v514 = vld [vmem:[%s8 + $0x38] sm:$0xff]
    %v515 = vld [vmem:[%s8 + $0x40] sm:$0xff]
    %v516 = vld [vmem:[%s8 + $0x48] sm:$0xff]
    %v517 = vld [vmem:[%s9] sm:$0xff]
    %v518 = vld [vmem:[%s9 + $0x8] sm:$0xff]
    %v519 = vld [vmem:[%s9 + $0x10] sm:$0xff]
    %v520 = vld [vmem:[%s9 + $0x18] sm:$0xff]
    %v521 = vld [vmem:[%s9 + $0x20] sm:$0xff]
    %v522 = vld [vmem:[%s9 + $0x28] sm:$0xff]
    %v523 = vld [vmem:[%s9 + $0x30] sm:$0xff]
    %v524 = vld [vmem:[%s9 + $0x38] sm:$0xff]
    %v525 = vld [vmem:[%s9 + $0x40] sm:$0xff]
    %v526 = vld [vmem:[%s9 + $0x48] sm:$0xff]
    %528 = vset.pattern.permute.xlu0 0
    %529 = vperm.xlu0 %528, %v517
    %v530 = vpop.permute.xlu0 %529
    %533 = vset.pattern.permute.xlu0 0
    %534 = vperm.xlu0 %533, %v518
    %v535 = vpop.permute.xlu0 %534
    %538 = vset.pattern.permute.xlu0 0
    %539 = vperm.xlu0 %538, %v519
    %v540 = vpop.permute.xlu0 %539
    %543 = vset.pattern.permute.xlu0 0
    %544 = vperm.xlu0 %543, %v520
    %v545 = vpop.permute.xlu0 %544
    %548 = vset.pattern.permute.xlu0 0
    %549 = vperm.xlu0 %548, %v521
    %v550 = vpop.permute.xlu0 %549
    %553 = vset.pattern.permute.xlu0 0
    %554 = vperm.xlu0 %553, %v522
    %v555 = vpop.permute.xlu0 %554
    %558 = vset.pattern.permute.xlu0 0
    %559 = vperm.xlu0 %558, %v523
    %v560 = vpop.permute.xlu0 %559
    %563 = vset.pattern.permute.xlu0 0
    %564 = vperm.xlu0 %563, %v524
    %v565 = vpop.permute.xlu0 %564
    %568 = vset.pattern.permute.xlu0 0
    %569 = vperm.xlu0 %568, %v525
    %v570 = vpop.permute.xlu0 %569
    %573 = vset.pattern.permute.xlu0 0
    %574 = vperm.xlu0 %573, %v526
    %v575 = vpop.permute.xlu0 %574
    %v577 = vlaneseq
    %v578 = vshrl.u32 %v577, 7
    %v579 = vsub.s32 0, %v578
    %v580 = vrot.slane %v504, %v579
    %v581 = vmul.f32 %v530, %v580
    %v582 = vmul.f32 %v535, %v580
    %v583 = vmul.f32 %v540, %v580
    %v584 = vmul.f32 %v545, %v580
    %v585 = vmul.f32 %v550, %v580
    %v586 = vmul.f32 %v555, %v580
    %v587 = vmul.f32 %v560, %v580
    %v588 = vmul.f32 %v565, %v580
    %v589 = vmul.f32 %v570, %v580
    %v590 = vmul.f32 %v575, %v580
    %v591 = vadd.f32 %v507, %v581
    %v592 = vadd.f32 %v508, %v582
    %v593 = vadd.f32 %v509, %v583
    %v594 = vadd.f32 %v510, %v584
    %v595 = vadd.f32 %v511, %v585
    %v596 = vadd.f32 %v512, %v586
    %v597 = vadd.f32 %v513, %v587
    %v598 = vadd.f32 %v514, %v588
    %v599 = vadd.f32 %v515, %v589
    %v600 = vadd.f32 %v516, %v590
    %v601 = vld [vmem:[%s10] sm:$0xff]
    %v602 = vld [vmem:[%s10 + $0x8] sm:$0xff]
    %v603 = vld [vmem:[%s10 + $0x10] sm:$0xff]
    %v604 = vld [vmem:[%s10 + $0x18] sm:$0xff]
    %v605 = vld [vmem:[%s10 + $0x20] sm:$0xff]
    %v606 = vld [vmem:[%s10 + $0x28] sm:$0xff]
    %v607 = vld [vmem:[%s10 + $0x30] sm:$0xff]
    %v608 = vld [vmem:[%s10 + $0x38] sm:$0xff]
    %v609 = vld [vmem:[%s10 + $0x40] sm:$0xff]
    %v610 = vld [vmem:[%s10 + $0x48] sm:$0xff]
    %v611 = vld [vmem:[%s10 + $0x50] sm:$0xff]
    %v612 = vld [vmem:[%s10 + $0x58] sm:$0xff]
    %v613 = vld [vmem:[%s10 + $0x60] sm:$0xff]
    %v614 = vld [vmem:[%s10 + $0x68] sm:$0xff]
    %v615 = vld [vmem:[%s10 + $0x70] sm:$0xff]
    %v616 = vld [vmem:[%s10 + $0x78] sm:$0xff]
    %v617 = vld [vmem:[%s11] sm:$0x1]
    %v619 = vlaneseq
    %v620 = vshrl.u32 %v619, 7
    %v621 = vsub.s32 0, %v620
    %v622 = vrot.slane %v617, %v621
    %624 = vmatprep.subr.mxu0 0.0
    %625 = vmatpush1.msra.mxu0 %v601
    %626 = vmatprep.subr.mxu0 0.0
    %627 = vmatpush1.msra.mxu0 %v602
    %628 = vmatprep.subr.mxu0 0.0
    %629 = vmatpush1.msra.mxu0 %v603
    %630 = vmatprep.subr.mxu0 0.0
    %631 = vmatpush1.msra.mxu0 %v604
    %632 = vmatprep.subr.mxu0 0.0
    %633 = vmatpush1.msra.mxu0 %v605
    %634 = vmatprep.subr.mxu0 0.0
    %635 = vmatpush1.msra.mxu0 %v606
    %636 = vmatprep.subr.mxu0 0.0
    %637 = vmatpush1.msra.mxu0 %v607
    %638 = vmatprep.subr.mxu0 0.0
    %639 = vmatpush1.msra.mxu0 %v608
    %640 = vmatprep.subr.mxu0 0.0
    %641 = vmatpush1.msra.mxu0 %v609
    %642 = vmatprep.subr.mxu0 0.0
    %643 = vmatpush1.msra.mxu0 %v610
    %644 = vmatprep.subr.mxu0 0.0
    %645 = vmatpush1.msra.mxu0 %v611
    %646 = vmatprep.subr.mxu0 0.0
    %647 = vmatpush1.msra.mxu0 %v612
    %648 = vmatprep.subr.mxu0 0.0
    %649 = vmatpush1.msra.mxu0 %v613
    %650 = vmatprep.subr.mxu0 0.0
    %651 = vmatpush1.msra.mxu0 %v614
    %652 = vmatprep.subr.mxu0 0.0
    %653 = vmatpush1.msra.mxu0 %v615
    %654 = vmatprep.subr.mxu0 0.0
    %655 = vmatpush1.msra.mxu0 %v616
    %656 = vmatprep.subr.mxu0 0.0
    %657 = vmatpush1.msra.mxu0 0.0
    %658 = vmatprep.subr.mxu0 0.0
    %659 = vmatpush1.msra.mxu0 0.0
    %660 = vmatprep.subr.mxu0 0.0
    %661 = vmatpush1.msra.mxu0 0.0
    %662 = vmatprep.subr.mxu0 0.0
    %663 = vmatpush1.msra.mxu0 0.0
    %664 = vmatprep.subr.mxu0 0.0
    %665 = vmatpush1.msra.mxu0 0.0
    %666 = vmatprep.subr.mxu0 0.0
    %667 = vmatpush1.msra.mxu0 0.0
    %668 = vmatprep.subr.mxu0 0.0
    %669 = vmatpush1.msra.mxu0 0.0
    %670 = vmatprep.subr.mxu0 0.0
    %671 = vmatpush1.msra.mxu0 0.0
    %672 = vmatprep.subr.mxu0 0.0
    %673 = vmatpush1.msra.mxu0 0.0
    %674 = vmatprep.subr.mxu0 0.0
    %675 = vmatpush1.msra.mxu0 0.0
    %676 = vmatprep.subr.mxu0 0.0
    %677 = vmatpush1.msra.mxu0 0.0
    %678 = vmatprep.subr.mxu0 0.0
    %679 = vmatpush1.msra.mxu0 0.0
    %680 = vmatprep.subr.mxu0 0.0
    %681 = vmatpush1.msra.mxu0 0.0
    %682 = vmatprep.subr.mxu0 0.0
    %683 = vmatpush1.msra.mxu0 0.0
    %684 = vmatprep.subr.mxu0 0.0
    %685 = vmatpush1.msra.mxu0 0.0
    %686 = vmatprep.subr.mxu0 0.0
    %687 = vmatpush1.msra.mxu0 0.0
    %688 = vmatprep.mubr.f32.mxu0 0.0
    %689 = vmatmul.mubr.f32.gmra.mrb[0].mxu0 %v591
    %v690 = vpop.f32.mrb[0].mxu0
    %v691 = vadd.f32 %v622, %v690
    %v692 = vpop.f32.mrb[0].mxu0
    %693 = vmatprep.mubr.f32.mxu0 0.0
    %694 = vmatmul.mubr.f32.gmra.mrb[0].mxu0 %v592
    %v695 = vpop.f32.mrb[0].mxu0
    %v696 = vadd.f32 %v622, %v695
    %v697 = vpop.f32.mrb[0].mxu0
    %698 = vmatprep.mubr.f32.mxu0 0.0
    %699 = vmatmul.mubr.f32.gmra.mrb[0].mxu0 %v593
    %v700 = vpop.f32.mrb[0].mxu0
    %v701 = vadd.f32 %v622, %v700
    %v702 = vpop.f32.mrb[0].mxu0
    %703 = vmatprep.mubr.f32.mxu0 0.0
    %704 = vmatmul.mubr.f32.gmra.mrb[0].mxu0 %v594
    %v705 = vpop.f32.mrb[0].mxu0
    %v706 = vadd.f32 %v622, %v705
    %v707 = vpop.f32.mrb[0].mxu0
    %708 = vmatprep.mubr.f32.mxu0 0.0
    %709 = vmatmul.mubr.f32.gmra.mrb[0].mxu0 %v595
    %v710 = vpop.f32.mrb[0].mxu0
    %v711 = vadd.f32 %v622, %v710
    %v712 = vpop.f32.mrb[0].mxu0
    %713 = vmatprep.mubr.f32.mxu0 0.0
    %714 = vmatmul.mubr.f32.gmra.mrb[0].mxu0 %v596
    %v715 = vpop.f32.mrb[0].mxu0
    %v716 = vadd.f32 %v622, %v715
    %v717 = vpop.f32.mrb[0].mxu0
    %718 = vmatprep.mubr.f32.mxu0 0.0
    %719 = vmatmul.mubr.f32.gmra.mrb[0].mxu0 %v597
    %v720 = vpop.f32.mrb[0].mxu0
    %v721 = vadd.f32 %v622, %v720
    %v722 = vpop.f32.mrb[0].mxu0
    %723 = vmatprep.mubr.f32.mxu0 0.0
    %724 = vmatmul.mubr.f32.gmra.mrb[0].mxu0 %v598
    %v725 = vpop.f32.mrb[0].mxu0
    %v726 = vadd.f32 %v622, %v725
    %v727 = vpop.f32.mrb[0].mxu0
    %728 = vmatprep.mubr.f32.mxu0 0.0
    %729 = vmatmul.mubr.f32.gmra.mrb[0].mxu0 %v599
    %v730 = vpop.f32.mrb[0].mxu0
    %v731 = vadd.f32 %v622, %v730
    %v732 = vpop.f32.mrb[0].mxu0
    %733 = vmatprep.mubr.f32.mxu0 0.0
    %734 = vmatmul.mubr.f32.gmra.mrb[0].mxu0 %v600
    %v735 = vpop.f32.mrb[0].mxu0
    %v736 = vadd.f32 %v622, %v735
    %v737 = vpop.f32.mrb[0].mxu0
    %738 = vdwg.mxu0
    %v739 = vmax.f32 %v691, 0.0
    %v740 = vmax.f32 %v696, 0.0
    %v741 = vmax.f32 %v701, 0.0
    %v742 = vmax.f32 %v706, 0.0
    %v743 = vmax.f32 %v711, 0.0
    %v744 = vmax.f32 %v716, 0.0
    %v745 = vmax.f32 %v721, 0.0
    %v746 = vmax.f32 %v726, 0.0
    %v747 = vmax.f32 %v731, 0.0
    %v748 = vmax.f32 %v736, 0.0
    %v749 = vadd.f32 %v591, %v739
    %v750 = vadd.f32 %v592, %v740
    %v751 = vadd.f32 %v593, %v741
    %v752 = vadd.f32 %v594, %v742
    %v753 = vadd.f32 %v595, %v743
    %v754 = vadd.f32 %v596, %v744
    %v755 = vadd.f32 %v597, %v745
    %v756 = vadd.f32 %v598, %v746
    %v757 = vadd.f32 %v599, %v747
    %v758 = vadd.f32 %v600, %v748
    %v759 = vld [vmem:[%s15] sm:$0xff]
    %v760 = vld [vmem:[%s15 + $0x8] sm:$0x3]
    %vm761 = vcmask 654336
    %v763 = vsel %vm761, %v759, 0
    %v766 = vsel %vm761, %v760, 0
    %768 = vmatprep.subr.mxu0 0.0
    %769 = vmatpush1.msra.mxu0 %v749
    %770 = vmatprep.subr.mxu0 0.0
    %771 = vmatpush1.msra.mxu0 %v750
    %772 = vmatprep.subr.mxu0 0.0
    %773 = vmatpush1.msra.mxu0 %v751
    %774 = vmatprep.subr.mxu0 0.0
    %775 = vmatpush1.msra.mxu0 %v752
    %776 = vmatprep.subr.mxu0 0.0
    %777 = vmatpush1.msra.mxu0 %v753
    %778 = vmatprep.subr.mxu0 0.0
    %779 = vmatpush1.msra.mxu0 %v754
    %780 = vmatprep.subr.mxu0 0.0
    %781 = vmatpush1.msra.mxu0 %v755
    %782 = vmatprep.subr.mxu0 0.0
    %783 = vmatpush1.msra.mxu0 %v756
    %784 = vmatprep.subr.mxu0 0.0
    %785 = vmatpush1.msra.mxu0 %v757
    %786 = vmatprep.subr.mxu0 0.0
    %787 = vmatpush1.msra.mxu0 %v758
    %788 = vmatprep.subr.mxu0 0.0
    %789 = vmatpush1.msra.mxu0 0.0
    %790 = vmatprep.subr.mxu0 0.0
    %791 = vmatpush1.msra.mxu0 0.0
    %792 = vmatprep.subr.mxu0 0.0
    %793 = vmatpush1.msra.mxu0 0.0
    %794 = vmatprep.subr.mxu0 0.0
    %795 = vmatpush1.msra.mxu0 0.0
    %796 = vmatprep.subr.mxu0 0.0
    %797 = vmatpush1.msra.mxu0 0.0
    %798 = vmatprep.subr.mxu0 0.0
    %799 = vmatpush1.msra.mxu0 0.0
    %800 = vmatprep.subr.mxu0 0.0
    %801 = vmatpush1.msra.mxu0 0.0
    %802 = vmatprep.subr.mxu0 0.0
    %803 = vmatpush1.msra.mxu0 0.0
    %804 = vmatprep.subr.mxu0 0.0
    %805 = vmatpush1.msra.mxu0 0.0
    %806 = vmatprep.subr.mxu0 0.0
    %807 = vmatpush1.msra.mxu0 0.0
    %808 = vmatprep.subr.mxu0 0.0
    %809 = vmatpush1.msra.mxu0 0.0
    %810 = vmatprep.subr.mxu0 0.0
    %811 = vmatpush1.msra.mxu0 0.0
    %812 = vmatprep.subr.mxu0 0.0
    %813 = vmatpush1.msra.mxu0 0.0
    %814 = vmatprep.subr.mxu0 0.0
    %815 = vmatpush1.msra.mxu0 0.0
    %816 = vmatprep.subr.mxu0 0.0
    %817 = vmatpush1.msra.mxu0 0.0
    %818 = vmatprep.subr.mxu0 0.0
    %819 = vmatpush1.msra.mxu0 0.0
    %820 = vmatprep.subr.mxu0 0.0
    %821 = vmatpush1.msra.mxu0 0.0
    %822 = vmatprep.subr.mxu0 0.0
    %823 = vmatpush1.msra.mxu0 0.0
    %824 = vmatprep.subr.mxu0 0.0
    %825 = vmatpush1.msra.mxu0 0.0
    %826 = vmatprep.subr.mxu0 0.0
    %827 = vmatpush1.msra.mxu0 0.0
    %828 = vmatprep.subr.mxu0 0.0
    %829 = vmatpush1.msra.mxu0 0.0
    %830 = vmatprep.subr.mxu0 0.0
    %831 = vmatpush1.msra.mxu0 0.0
    %832 = vmatprep.mubr.f32.mxu0 0.0
    %833 = vmatmul.mubr.f32.gmra.mrb[0].mxu0 %v763
    %v834 = vpop.f32.mrb[0].mxu0
    %v835 = vadd.f32 0.0, %v834
    %v836 = vpop.f32.mrb[0].mxu0
    %837 = vmatprep.mubr.f32.mxu0 0.0
    %838 = vmatmul.mubr.f32.gmra.mrb[0].mxu0 %v766
    %v839 = vpop.f32.mrb[0].mxu0
    %v840 = vadd.f32 0.0, %v839
    %v841 = vpop.f32.mrb[0].mxu0
    %842 = vdwg.mxu0
    %843 = vadd.xlane.f32.xlu0 %v835
    %v844 = vpop.xlane.xlu0 %843
    %v845 = vsel %vm325, %v840, 0.0
    %846 = vadd.xlane.f32.xlu0 %v845
    %v847 = vpop.xlane.xlu0 %846
    %v848 = vrcp.pop 128.0
    %v849 = vmul.f32 %v844, %v848
    %v850 = vmul.f32 %v847, %v848
    %v851 = vsub.f32 %v835, %v849
    %v852 = vsub.f32 %v840, %v850
    %v853 = vmul.f32 %v851, %v851
    %v854 = vmul.f32 %v852, %v852
    %855 = vadd.xlane.f32.xlu0 %v853
    %v856 = vpop.xlane.xlu0 %855
    %v857 = vsel %vm325, %v854, 0.0
    %858 = vadd.xlane.f32.xlu0 %v857
    %v859 = vpop.xlane.xlu0 %858
    %v860 = vmul.f32 %v856, %v848
    %v861 = vmul.f32 %v859, %v848
    %v862 = vadd.f32 %v860, 1e-05
    %v863 = vadd.f32 %v861, 1e-05
    %v864 = vrsqrt.pop %v862
    %v865 = vrsqrt.pop %v863
    %v866 = vmul.f32 %v851, %v864
    %v867 = vmul.f32 %v852, %v865
    %v868 = vld [vmem:[%s12] sm:$0x1]
    %v870 = vlaneseq
    %v871 = vshrl.u32 %v870, 7
    %v872 = vsub.s32 0, %v871
    %v873 = vrot.slane %v868, %v872
    %v875 = vmul.f32 %v866, %v873
    %v876 = vmul.f32 %v867, %v873
    %v877 = vld [vmem:[%s13] sm:$0x1]
    %v879 = vlaneseq
    %v880 = vshrl.u32 %v879, 7
    %v881 = vsub.s32 0, %v880
    %v882 = vrot.slane %v877, %v881
    %v884 = vadd.f32 %v875, %v882
    %v885 = vadd.f32 %v876, %v882
    %v886 = vld [vmem:[%s14] sm:$0xff]
    %v887 = vld [vmem:[%s14 + $0x8] sm:$0xff]
    %v888 = vld [vmem:[%s14 + $0x10] sm:$0xff]
    %v889 = vld [vmem:[%s14 + $0x18] sm:$0xff]
    %v890 = vld [vmem:[%s14 + $0x20] sm:$0xff]
    %v891 = vld [vmem:[%s14 + $0x28] sm:$0xff]
    %v892 = vld [vmem:[%s14 + $0x30] sm:$0xff]
    %v893 = vld [vmem:[%s14 + $0x38] sm:$0xff]
    %v894 = vld [vmem:[%s14 + $0x40] sm:$0xff]
    %v895 = vld [vmem:[%s14 + $0x48] sm:$0xff]
    %v896 = vld [vmem:[%s14 + $0x50] sm:$0xff]
    %v897 = vld [vmem:[%s14 + $0x58] sm:$0xff]
    %v898 = vld [vmem:[%s14 + $0x60] sm:$0xff]
    %v899 = vld [vmem:[%s14 + $0x68] sm:$0xff]
    %v900 = vld [vmem:[%s14 + $0x70] sm:$0xff]
    %v901 = vld [vmem:[%s14 + $0x78] sm:$0xff]
    %902 = vmatprep.subr.mxu0 0.0
    %903 = vmatpush1.msra.mxu0 %v886
    %904 = vmatprep.subr.mxu0 0.0
    %905 = vmatpush1.msra.mxu0 %v887
    %906 = vmatprep.subr.mxu0 0.0
    %907 = vmatpush1.msra.mxu0 %v888
    %908 = vmatprep.subr.mxu0 0.0
    %909 = vmatpush1.msra.mxu0 %v889
    %910 = vmatprep.subr.mxu0 0.0
    %911 = vmatpush1.msra.mxu0 %v890
    %912 = vmatprep.subr.mxu0 0.0
    %913 = vmatpush1.msra.mxu0 %v891
    %914 = vmatprep.subr.mxu0 0.0
    %915 = vmatpush1.msra.mxu0 %v892
    %916 = vmatprep.subr.mxu0 0.0
    %917 = vmatpush1.msra.mxu0 %v893
    %918 = vmatprep.subr.mxu0 0.0
    %919 = vmatpush1.msra.mxu0 %v894
    %920 = vmatprep.subr.mxu0 0.0
    %921 = vmatpush1.msra.mxu0 %v895
    %922 = vmatprep.subr.mxu0 0.0
    %923 = vmatpush1.msra.mxu0 %v896
    %924 = vmatprep.subr.mxu0 0.0
    %925 = vmatpush1.msra.mxu0 %v897
    %926 = vmatprep.subr.mxu0 0.0
    %927 = vmatpush1.msra.mxu0 %v898
    %928 = vmatprep.subr.mxu0 0.0
    %929 = vmatpush1.msra.mxu0 %v899
    %930 = vmatprep.subr.mxu0 0.0
    %931 = vmatpush1.msra.mxu0 %v900
    %932 = vmatprep.subr.mxu0 0.0
    %933 = vmatpush1.msra.mxu0 %v901
    %934 = vmatprep.subr.mxu0 0.0
    %935 = vmatpush1.msra.mxu0 0.0
    %936 = vmatprep.subr.mxu0 0.0
    %937 = vmatpush1.msra.mxu0 0.0
    %938 = vmatprep.subr.mxu0 0.0
    %939 = vmatpush1.msra.mxu0 0.0
    %940 = vmatprep.subr.mxu0 0.0
    %941 = vmatpush1.msra.mxu0 0.0
    %942 = vmatprep.subr.mxu0 0.0
    %943 = vmatpush1.msra.mxu0 0.0
    %944 = vmatprep.subr.mxu0 0.0
    %945 = vmatpush1.msra.mxu0 0.0
    %946 = vmatprep.subr.mxu0 0.0
    %947 = vmatpush1.msra.mxu0 0.0
    %948 = vmatprep.subr.mxu0 0.0
    %949 = vmatpush1.msra.mxu0 0.0
    %950 = vmatprep.subr.mxu0 0.0
    %951 = vmatpush1.msra.mxu0 0.0
    %952 = vmatprep.subr.mxu0 0.0
    %953 = vmatpush1.msra.mxu0 0.0
    %954 = vmatprep.subr.mxu0 0.0
    %955 = vmatpush1.msra.mxu0 0.0
    %956 = vmatprep.subr.mxu0 0.0
    %957 = vmatpush1.msra.mxu0 0.0
    %958 = vmatprep.subr.mxu0 0.0
    %959 = vmatpush1.msra.mxu0 0.0
    %960 = vmatprep.subr.mxu0 0.0
    %961 = vmatpush1.msra.mxu0 0.0
    %962 = vmatprep.subr.mxu0 0.0
    %963 = vmatpush1.msra.mxu0 0.0
    %964 = vmatprep.subr.mxu0 0.0
    %965 = vmatpush1.msra.mxu0 0.0
    %966 = vmatprep.mubr.f32.mxu0 0.0
    %967 = vmatmul.mubr.f32.gmra.mrb[0].mxu0 %v884
    %v968 = vpop.f32.mrb[0].mxu0
    %v969 = vadd.f32 0.0, %v968
    %v970 = vpop.f32.mrb[0].mxu0
    %971 = vmatprep.mubr.f32.mxu0 0.0
    %972 = vmatmul.mubr.f32.gmra.mrb[0].mxu0 %v885
    %v973 = vpop.f32.mrb[0].mxu0
    %v974 = vadd.f32 0.0, %v973
    %v975 = vpop.f32.mrb[0].mxu0
    %976 = vdwg.mxu0
    %v977 = vmul.f32 %v969, %v969
    %v978 = vmul.f32 %v974, %v974
    %979 = vadd.xlane.f32.xlu0 %v977
    %v980 = vpop.xlane.xlu0 %979
    %v981 = vsel %vm325, %v978, 0.0
    %982 = vadd.xlane.f32.xlu0 %v981
    %v983 = vpop.xlane.xlu0 %982
    %v984 = vrsqrt.pop %v980
    %v985 = vrsqrt.pop %v983
    %v986 = vmul.f32 %v969, %v984
    %v987 = vmul.f32 %v974, %v985
    %vm990 = vcmask 1042432
    %v991 = vrot.slane %v986, 5
    %v992 = vrot.slane %v987, 5
    %v993 = vsel %vm990, %v991, %v992
    %v995 = vadd.f32 %v986, %v993
    %v996 = vmul.f32 %v995, 0.5
    %997 = vst [vmem:[#allocation4] sm:$0x1f] %v996
    // Predicated region
    $region66: #{eclip_forward.1} parent=1 // pred_check
      _
    $region67: #{eclip_forward.1} parent=1 // pred_check_branch
      %999 = sbr.rel (0) target = $region69
    $region68: #{eclip_forward.1} parent=1 // pred_region
      %s1001 = ssub.s32 32, 32
      %1002 = vsyncadd [#allocation3], %s1001
      %s1004 = sshll.u32 [#allocation2], 4
      %s1005 = int_to_ptr.vmem [resolvable:$true] %s1004
      %1007 = dma.vmem_to_hbm [thread:$0]  %s1005, 32, %s16, [#allocation3]
    $region69: #{eclip_forward.1} parent=1 // pred_fallthru
      _
    // Predicated region
    $region70: #{eclip_forward.1} parent=1 // pred_check
      _
    $region71: #{eclip_forward.1} parent=1 // pred_check_branch
      %1009 = sbr.rel (0) target = $region73
    $region72: #{eclip_forward.1} parent=1 // pred_region
      %s1011 = ssub.s32 128, 128
      %1012 = vsyncadd [#allocation5], %s1011
      %s1014 = sshll.u32 [#allocation4], 4
      %s1015 = int_to_ptr.vmem [resolvable:$true] %s1014
      %1017 = dma.vmem_to_hbm [thread:$0]  %s1015, 128, %s17, [#allocation5]
    $region73: #{eclip_forward.1} parent=1 // pred_fallthru
      _
    // Predicated region
    $region74: #{eclip_forward.1} parent=1 // pred_check
      _
    $region75: #{eclip_forward.1} parent=1 // pred_check_branch
      %1019 = sbr.rel (0) target = $region77
    $region76: #{eclip_forward.1} parent=1 // pred_region
      %1020 = dma.done [#allocation3], 32
    $region77: #{eclip_forward.1} parent=1 // pred_fallthru
      _
    // Predicated region
    $region78: #{eclip_forward.1} parent=1 // pred_check
      _
    $region79: #{eclip_forward.1} parent=1 // pred_check_branch
      %1022 = sbr.rel (0) target = $region81
    $region80: #{eclip_forward.1} parent=1 // pred_region
      %1023 = dma.done [#allocation5], 128
    $region81: #{eclip_forward.1} parent=1 // pred_fallthru
      _
    %1024 = vsyncpa [#allocation3], 1
    %1025 = vsyncpa [#allocation5], 1

</llo_original>
